<compile_context>
chip_gen: v5e
topology: v5e:2x2
jax: 0.10.0
libtpu: 0.0.40
codegen_flags: <defaults>
</compile_context>

<pallas_src>
import jax
import jax.numpy as jnp
from jax.experimental import pallas as pl
from jax.experimental.pallas import tpu as pltpu


_ROWS_TARGET = 4096                       # TBL*N rows per grid step (amortize ~0.35us/step)
_VMEM_STEP_BUDGET = 12 * 1024 * 1024      # per-step VMEM budget, safe on v7x (64 MiB VMEM)


def _make_satt3_kernel(TBL, N, C):
    Cq = C // 4
    use_vpu = Cq <= 32                    # tiny contraction -> VPU broadcast-FMA
    f_dtype = jnp.float32 if use_vpu else jnp.bfloat16

    def kernel(x_ref, w_ref, o_ref):
        # x_ref : (TBL*N, C12) bf16 -- TBL (b,l) pairs stacked along rows
        # w_ref : (C12, 2C)    bf16 -- [conv1 | conv2] weights, m-major columns
        # o_ref : (TBL, N*N)   f32  -- lane-dense mean_m sigmoid(logits_m)
        # Fused 1x1 convs: one MXU matmul, f32 accumulation on the MXU.
        f = jnp.dot(x_ref[...], w_ref[...], preferred_element_type=f_dtype)
        f = f.reshape(TBL, N, 2 * C)                       # leading-dim split only

        if use_vpu:
            # mean_m sigmoid(s_m) = 0.5 + 0.125 * sum_m tanh(0.5 * s_m)
            out = jnp.full((TBL, N, N), 0.5, dtype=jnp.float32)
            for m in range(4):                             # static unroll (4*Cq FMAs)
                s = None
                for c in range(Cq):
                    a = f[:, :, m * Cq + c]                # (TBL, N)  f1, group m
                    b = f[:, :, C + m * Cq + c]            # (TBL, N)  f2, group m
                    term = a[:, :, None] * b[:, None, :]   # outer product (TBL, N, N)
                    s = term if s is None else s + term
                out = out + 0.125 * jnp.tanh(0.5 * s)
        else:
            # Large-Cq path: one dot_general batched over (TBL, 4) groups.
            f1 = jnp.transpose(f[:, :, :C].reshape(TBL, N, 4, Cq), (0, 2, 1, 3))
            f2 = jnp.transpose(f[:, :, C:].reshape(TBL, N, 4, Cq), (0, 2, 1, 3))
            s = jax.lax.dot_general(f1, f2, (((3,), (3,)), ((0, 1), (0, 1))),
                                    preferred_element_type=jnp.float32)  # (TBL,4,N,N)
            out = 0.5 + 0.125 * jnp.sum(jnp.tanh(0.5 * s), axis=1)

        # Lane-dense store: one (N,N)->(N*N) relayout per tile, unmasked vst.
        o_ref[...] = out.reshape(TBL, N * N).astype(o_ref.dtype)

    return kernel


def _pick_tbl(BL, N, C, C12):
    """Pick TBL (number of (b,l) pairs per grid step).

    Constraints: TBL divides BL; block second-minor dims legal ((TBL % 8 == 0
    and (TBL*N) % 8 == 0) or TBL == BL); per-step VMEM under budget; rows
    under _ROWS_TARGET.  Prefers >=2 grid steps (v7x megacore)."""

    def step_bytes(d):
        rows = d * N
        x_b = 2 * rows * C12 * 2            # double-buffered bf16 input block
        out_b = 2 * d * N * N * 4           # double-buffered f32 output block
        f_b = rows * 2 * C * 4              # conv activations (f32 worst case)
        wrk_b = 2 * d * N * N * 4           # s + out working arrays
        w_b = 2 * C12 * 2 * C * 2           # resident fused weight (bf16)
        return x_b + out_b + f_b + wrk_b + w_b

    divs = [d for d in range(1, BL + 1) if BL % d == 0]

    def legal(d):
        ok_out = (d % 8 == 0) or (d == BL)
        ok_in = ((d * N) % 8 == 0) or (d == BL)
        return ok_out and ok_in

    cands = [d for d in divs if legal(d)
             and d * N <= _ROWS_TARGET and step_bytes(d) <= _VMEM_STEP_BUDGET]
    if not cands:
        return BL                           # full-extent block: always legal
    multi = [d for d in cands if BL // d >= 2]
    return max(multi) if multi else max(cands)


@jax.jit
def satt3_forward(seq, w1, w2):
    """seq: (B, c_in, N, T) float32 (PyTorch NCHW convention), T % 12 == 0.
    w1, w2: (c_in, c_in*12) 1x1-conv weights (kernel dims squeezed)."""
    B, C, N, T = seq.shape
    assert T % 12 == 0 and C % 4 == 0
    L = T // 12
    C12 = C * 12
    Cq = C // 4
    BL = B * L

    # ---- glue: single-pass repack + bf16 cast -----------------------------
    # torch chain maps seq[b,c,n,t] (t = u*L + l) to conv-input channel
    # c12 = c*12 + u at (node n, time-block l).  Rows = (b,l,n), cols = (c,u).
    x = seq.astype(jnp.bfloat16).reshape(B, C, N, 12, L)
    x = jnp.transpose(x, (0, 4, 2, 1, 3)).reshape(BL * N, C12)   # one transpose

    # ---- glue: reorder conv output channels m-major and fuse both convs ---
    # torch output channel o = q*4 + m  ->  kernel column k = m*Cq + q
    def reorder(w):   # (C, C12) -> (C12, C)
        return jnp.transpose(w.reshape(Cq, 4, C12), (1, 0, 2)).reshape(C, C12).T

    w = jnp.concatenate([reorder(w1), reorder(w2)], axis=1).astype(jnp.bfloat16)

    TBL = _pick_tbl(BL, N, C, C12)
    NB = BL // TBL

    out = pl.pallas_call(
        _make_satt3_kernel(TBL, N, C),
        out_shape=jax.ShapeDtypeStruct((BL, N * N), jnp.float32),
        grid_spec=pltpu.PrefetchScalarGridSpec(
            num_scalar_prefetch=0,
            grid=(NB,),
            in_specs=[
                pl.BlockSpec((TBL * N, C12), lambda g: (g, 0)),
                pl.BlockSpec((C12, 2 * C), lambda g: (0, 0)),    # resident weight
            ],
            out_specs=pl.BlockSpec((TBL, N * N), lambda g: (g, 0)),
        ),
        compiler_params=pltpu.CompilerParams(
            dimension_semantics=("parallel",),
            vmem_limit_bytes=32 * 1024 * 1024),
    )(x, w)

    return out.reshape(B, L, N, N).astype(seq.dtype)             # free reshape


def satt3_reference(seq, w1, w2):
    """Pure-JAX f32 transcription of the torch forward, used for verification."""
    B, C, N, T = seq.shape
    L = T // 12
    s = jnp.transpose(seq, (0, 1, 3, 2)).reshape(B, C * 12, L, N)
    s = jnp.transpose(s, (0, 1, 3, 2))                 # (B, C12, N, L)
    f1 = jnp.einsum('oc,bcnl->bonl', w1, s)            # 1x1 conv, no bias
    f2 = jnp.einsum('oc,bcnl->bonl', w2, s)
    f1 = jnp.transpose(f1.reshape(B, C // 4, 4, N, L), (0, 3, 1, 4, 2))
    f2 = jnp.transpose(f2.reshape(B, C // 4, 4, N, L), (0, 1, 3, 4, 2))
    logits = jnp.einsum('bnclm,bcqlm->bnqlm', f1, f2)
    logits = jnp.transpose(logits, (0, 3, 1, 2, 4))    # (B, L, N, N, 4)
    return jnp.mean(jax.nn.sigmoid(logits), axis=-1)


if __name__ == "__main__":
    key = jax.random.PRNGKey(0)
    k1, k2, k3 = jax.random.split(key, 3)

    B, c_in, N, T = 2, 8, 16, 24            # T = 12 * L  ->  L = 2
    seq = jax.random.normal(k1, (B, c_in, N, T), dtype=jnp.float32)
    # deterministic synthetic 1x1-conv weights (conv1 / conv2, bias=False)
    w1 = jax.random.normal(k2, (c_in, c_in * 12), dtype=jnp.float32) * 0.1
    w2 = jax.random.normal(k3, (c_in, c_in * 12), dtype=jnp.float32) * 0.1

    out = jax.block_until_ready(satt3_forward(seq, w1, w2))
    ref = jax.block_until_ready(satt3_reference(seq, w1, w2))

    assert out.shape == (B, T // 12, N, N)
    # bf16 MXU operands (f32 accumulation everywhere else) -> small tolerance.
    assert jnp.allclose(out, ref, atol=2e-2, rtol=2e-2), \
        float(jnp.max(jnp.abs(out - ref)))
    print("KERNEL_OK")
</pallas_src>

<mosaic_0001>
module attributes {stable_mosaic.version = 11 : i64} {
  func.func @kernel(%arg0: i32, %arg1: memref<64x96xbf16, #tpu.memory_space<vmem>>, %arg2: memref<96x16xbf16, #tpu.memory_space<vmem>>, %arg3: memref<4x256xf32, #tpu.memory_space<vmem>>) attributes {dimension_semantics = [#tpu.dimension_semantics<parallel>], iteration_bounds = array<i64: 1>, scalar_prefetch = 0 : i64, scratch_operands = 0 : i64, tpu.core_type = #tpu.core_type<tc>, window_params = [{transform_indices = @transform_0, window_bounds = array<i64: 64, 96>}, {pipeline_mode = #tpu.pipeline_mode<synchronous>, transform_indices = @transform_1, window_bounds = array<i64: 96, 16>}, {transform_indices = @transform_2, window_bounds = array<i64: 4, 256>}]} {
    %c0 = arith.constant 0 : index
    %c0_0 = arith.constant 0 : index
    %0 = vector.load %arg1[%c0, %c0_0] : memref<64x96xbf16, #tpu.memory_space<vmem>>, vector<64x96xbf16>
    %c0_1 = arith.constant 0 : index
    %c0_2 = arith.constant 0 : index
    %1 = vector.load %arg2[%c0_1, %c0_2] : memref<96x16xbf16, #tpu.memory_space<vmem>>, vector<96x16xbf16>
    %cst = arith.constant dense<0.000000e+00> : vector<64x16xf32>
    %2 = tpu.matmul %0, %1, %cst {dimension_numbers = #tpu.dot_dimension_numbers<[1], [0], [0], [1], [0, 0, 1, 1], [], []>} : vector<64x96xbf16>, vector<96x16xbf16>, vector<64x16xf32> -> vector<64x16xf32>
    %3 = vector.shape_cast %2 : vector<64x16xf32> to vector<4x16x16xf32>
    %cst_3 = arith.constant 5.000000e-01 : f32
    %4 = vector.broadcast %cst_3 : f32 to vector<4x16x16xf32>
    %5 = vector.extract_strided_slice %3 {offsets = [0, 0, 0], sizes = [4, 16, 1], strides = [1, 1, 1]} : vector<4x16x16xf32> to vector<4x16x1xf32>
    %6 = vector.shape_cast %5 : vector<4x16x1xf32> to vector<4x16xf32>
    %7 = vector.extract_strided_slice %3 {offsets = [0, 0, 8], sizes = [4, 16, 1], strides = [1, 1, 1]} : vector<4x16x16xf32> to vector<4x16x1xf32>
    %8 = vector.shape_cast %7 : vector<4x16x1xf32> to vector<4x16xf32>
    %9 = vector.shape_cast %6 : vector<4x16xf32> to vector<4x16x1xf32>
    %10 = vector.shape_cast %8 : vector<4x16xf32> to vector<4x1x16xf32>
    %11 = vector.broadcast %9 : vector<4x16x1xf32> to vector<4x16x16xf32>
    %12 = vector.broadcast %10 : vector<4x1x16xf32> to vector<4x16x16xf32>
    %13 = arith.mulf %11, %12 : vector<4x16x16xf32>
    %14 = vector.extract_strided_slice %3 {offsets = [0, 0, 1], sizes = [4, 16, 1], strides = [1, 1, 1]} : vector<4x16x16xf32> to vector<4x16x1xf32>
    %15 = vector.shape_cast %14 : vector<4x16x1xf32> to vector<4x16xf32>
    %16 = vector.extract_strided_slice %3 {offsets = [0, 0, 9], sizes = [4, 16, 1], strides = [1, 1, 1]} : vector<4x16x16xf32> to vector<4x16x1xf32>
    %17 = vector.shape_cast %16 : vector<4x16x1xf32> to vector<4x16xf32>
    %18 = vector.shape_cast %15 : vector<4x16xf32> to vector<4x16x1xf32>
    %19 = vector.shape_cast %17 : vector<4x16xf32> to vector<4x1x16xf32>
    %20 = vector.broadcast %18 : vector<4x16x1xf32> to vector<4x16x16xf32>
    %21 = vector.broadcast %19 : vector<4x1x16xf32> to vector<4x16x16xf32>
    %22 = arith.mulf %20, %21 : vector<4x16x16xf32>
    %23 = arith.addf %13, %22 : vector<4x16x16xf32>
    %cst_4 = arith.constant 5.000000e-01 : f32
    %24 = vector.broadcast %cst_4 : f32 to vector<4x16x16xf32>
    %25 = arith.mulf %24, %23 : vector<4x16x16xf32>
    %26 = math.tanh %25 : vector<4x16x16xf32>
    %cst_5 = arith.constant 1.250000e-01 : f32
    %27 = vector.broadcast %cst_5 : f32 to vector<4x16x16xf32>
    %28 = arith.mulf %27, %26 : vector<4x16x16xf32>
    %29 = arith.addf %4, %28 : vector<4x16x16xf32>
    %30 = vector.extract_strided_slice %3 {offsets = [0, 0, 2], sizes = [4, 16, 1], strides = [1, 1, 1]} : vector<4x16x16xf32> to vector<4x16x1xf32>
    %31 = vector.shape_cast %30 : vector<4x16x1xf32> to vector<4x16xf32>
    %32 = vector.extract_strided_slice %3 {offsets = [0, 0, 10], sizes = [4, 16, 1], strides = [1, 1, 1]} : vector<4x16x16xf32> to vector<4x16x1xf32>
    %33 = vector.shape_cast %32 : vector<4x16x1xf32> to vector<4x16xf32>
    %34 = vector.shape_cast %31 : vector<4x16xf32> to vector<4x16x1xf32>
    %35 = vector.shape_cast %33 : vector<4x16xf32> to vector<4x1x16xf32>
    %36 = vector.broadcast %34 : vector<4x16x1xf32> to vector<4x16x16xf32>
    %37 = vector.broadcast %35 : vector<4x1x16xf32> to vector<4x16x16xf32>
    %38 = arith.mulf %36, %37 : vector<4x16x16xf32>
    %39 = vector.extract_strided_slice %3 {offsets = [0, 0, 3], sizes = [4, 16, 1], strides = [1, 1, 1]} : vector<4x16x16xf32> to vector<4x16x1xf32>
    %40 = vector.shape_cast %39 : vector<4x16x1xf32> to vector<4x16xf32>
    %41 = vector.extract_strided_slice %3 {offsets = [0, 0, 11], sizes = [4, 16, 1], strides = [1, 1, 1]} : vector<4x16x16xf32> to vector<4x16x1xf32>
    %42 = vector.shape_cast %41 : vector<4x16x1xf32> to vector<4x16xf32>
    %43 = vector.shape_cast %40 : vector<4x16xf32> to vector<4x16x1xf32>
    %44 = vector.shape_cast %42 : vector<4x16xf32> to vector<4x1x16xf32>
    %45 = vector.broadcast %43 : vector<4x16x1xf32> to vector<4x16x16xf32>
    %46 = vector.broadcast %44 : vector<4x1x16xf32> to vector<4x16x16xf32>
    %47 = arith.mulf %45, %46 : vector<4x16x16xf32>
    %48 = arith.addf %38, %47 : vector<4x16x16xf32>
    %cst_6 = arith.constant 5.000000e-01 : f32
    %49 = vector.broadcast %cst_6 : f32 to vector<4x16x16xf32>
    %50 = arith.mulf %49, %48 : vector<4x16x16xf32>
    %51 = math.tanh %50 : vector<4x16x16xf32>
    %cst_7 = arith.constant 1.250000e-01 : f32
    %52 = vector.broadcast %cst_7 : f32 to vector<4x16x16xf32>
    %53 = arith.mulf %52, %51 : vector<4x16x16xf32>
    %54 = arith.addf %29, %53 : vector<4x16x16xf32>
    %55 = vector.extract_strided_slice %3 {offsets = [0, 0, 4], sizes = [4, 16, 1], strides = [1, 1, 1]} : vector<4x16x16xf32> to vector<4x16x1xf32>
    %56 = vector.shape_cast %55 : vector<4x16x1xf32> to vector<4x16xf32>
    %57 = vector.extract_strided_slice %3 {offsets = [0, 0, 12], sizes = [4, 16, 1], strides = [1, 1, 1]} : vector<4x16x16xf32> to vector<4x16x1xf32>
    %58 = vector.shape_cast %57 : vector<4x16x1xf32> to vector<4x16xf32>
    %59 = vector.shape_cast %56 : vector<4x16xf32> to vector<4x16x1xf32>
    %60 = vector.shape_cast %58 : vector<4x16xf32> to vector<4x1x16xf32>
    %61 = vector.broadcast %59 : vector<4x16x1xf32> to vector<4x16x16xf32>
    %62 = vector.broadcast %60 : vector<4x1x16xf32> to vector<4x16x16xf32>
    %63 = arith.mulf %61, %62 : vector<4x16x16xf32>
    %64 = vector.extract_strided_slice %3 {offsets = [0, 0, 5], sizes = [4, 16, 1], strides = [1, 1, 1]} : vector<4x16x16xf32> to vector<4x16x1xf32>
    %65 = vector.shape_cast %64 : vector<4x16x1xf32> to vector<4x16xf32>
    %66 = vector.extract_strided_slice %3 {offsets = [0, 0, 13], sizes = [4, 16, 1], strides = [1, 1, 1]} : vector<4x16x16xf32> to vector<4x16x1xf32>
    %67 = vector.shape_cast %66 : vector<4x16x1xf32> to vector<4x16xf32>
    %68 = vector.shape_cast %65 : vector<4x16xf32> to vector<4x16x1xf32>
    %69 = vector.shape_cast %67 : vector<4x16xf32> to vector<4x1x16xf32>
    %70 = vector.broadcast %68 : vector<4x16x1xf32> to vector<4x16x16xf32>
    %71 = vector.broadcast %69 : vector<4x1x16xf32> to vector<4x16x16xf32>
    %72 = arith.mulf %70, %71 : vector<4x16x16xf32>
    %73 = arith.addf %63, %72 : vector<4x16x16xf32>
    %cst_8 = arith.constant 5.000000e-01 : f32
    %74 = vector.broadcast %cst_8 : f32 to vector<4x16x16xf32>
    %75 = arith.mulf %74, %73 : vector<4x16x16xf32>
    %76 = math.tanh %75 : vector<4x16x16xf32>
    %cst_9 = arith.constant 1.250000e-01 : f32
    %77 = vector.broadcast %cst_9 : f32 to vector<4x16x16xf32>
    %78 = arith.mulf %77, %76 : vector<4x16x16xf32>
    %79 = arith.addf %54, %78 : vector<4x16x16xf32>
    %80 = vector.extract_strided_slice %3 {offsets = [0, 0, 6], sizes = [4, 16, 1], strides = [1, 1, 1]} : vector<4x16x16xf32> to vector<4x16x1xf32>
    %81 = vector.shape_cast %80 : vector<4x16x1xf32> to vector<4x16xf32>
    %82 = vector.extract_strided_slice %3 {offsets = [0, 0, 14], sizes = [4, 16, 1], strides = [1, 1, 1]} : vector<4x16x16xf32> to vector<4x16x1xf32>
    %83 = vector.shape_cast %82 : vector<4x16x1xf32> to vector<4x16xf32>
    %84 = vector.shape_cast %81 : vector<4x16xf32> to vector<4x16x1xf32>
    %85 = vector.shape_cast %83 : vector<4x16xf32> to vector<4x1x16xf32>
    %86 = vector.broadcast %84 : vector<4x16x1xf32> to vector<4x16x16xf32>
    %87 = vector.broadcast %85 : vector<4x1x16xf32> to vector<4x16x16xf32>
    %88 = arith.mulf %86, %87 : vector<4x16x16xf32>
    %89 = vector.extract_strided_slice %3 {offsets = [0, 0, 7], sizes = [4, 16, 1], strides = [1, 1, 1]} : vector<4x16x16xf32> to vector<4x16x1xf32>
    %90 = vector.shape_cast %89 : vector<4x16x1xf32> to vector<4x16xf32>
    %91 = vector.extract_strided_slice %3 {offsets = [0, 0, 15], sizes = [4, 16, 1], strides = [1, 1, 1]} : vector<4x16x16xf32> to vector<4x16x1xf32>
    %92 = vector.shape_cast %91 : vector<4x16x1xf32> to vector<4x16xf32>
    %93 = vector.shape_cast %90 : vector<4x16xf32> to vector<4x16x1xf32>
    %94 = vector.shape_cast %92 : vector<4x16xf32> to vector<4x1x16xf32>
    %95 = vector.broadcast %93 : vector<4x16x1xf32> to vector<4x16x16xf32>
    %96 = vector.broadcast %94 : vector<4x1x16xf32> to vector<4x16x16xf32>
    %97 = arith.mulf %95, %96 : vector<4x16x16xf32>
    %98 = arith.addf %88, %97 : vector<4x16x16xf32>
    %cst_10 = arith.constant 5.000000e-01 : f32
    %99 = vector.broadcast %cst_10 : f32 to vector<4x16x16xf32>
    %100 = arith.mulf %99, %98 : vector<4x16x16xf32>
    %101 = math.tanh %100 : vector<4x16x16xf32>
    %cst_11 = arith.constant 1.250000e-01 : f32
    %102 = vector.broadcast %cst_11 : f32 to vector<4x16x16xf32>
    %103 = arith.mulf %102, %101 : vector<4x16x16xf32>
    %104 = arith.addf %79, %103 : vector<4x16x16xf32>
    %105 = vector.shape_cast %104 : vector<4x16x16xf32> to vector<4x256xf32>
    %c0_12 = arith.constant 0 : index
    %c0_13 = arith.constant 0 : index
    %106 = vector.load %arg3[%c0_12, %c0_13] : memref<4x256xf32, #tpu.memory_space<vmem>>, vector<4x256xf32>
    tpu.vector_store %arg3[%c0_12, %c0_13], %105 {strides = array<i32>} : memref<4x256xf32, #tpu.memory_space<vmem>>, vector<4x256xf32>,
    return
  }
  func.func @transform_0(%arg0: i32) -> (i32, i32) {
    %c0_i32 = arith.constant 0 : i32
    %c0_i32_0 = arith.constant 0 : i32
    return %arg0, %c0_i32 : i32, i32
  }
  func.func @transform_1(%arg0: i32) -> (i32, i32) {
    %c0_i32 = arith.constant 0 : i32
    %c0_i32_0 = arith.constant 0 : i32
    %c0_i32_1 = arith.constant 0 : i32
    return %c0_i32, %c0_i32_0 : i32, i32
  }
  func.func @transform_2(%arg0: i32) -> (i32, i32) {
    %c0_i32 = arith.constant 0 : i32
    %c0_i32_0 = arith.constant 0 : i32
    return %arg0, %c0_i32 : i32, i32
  }
}

</mosaic_0001>

<llo_original>
// kernel: satt3_forward.1
$region0: #{satt3_forward.1}
  #allocation0 [shape = 'u32[]', space=smem, size = 0x4, offset = 0x4, fixed_abs, tag = 'smem constant byte address 0x4 - core index']
  #allocation1 [shape = 'u32[72,128]{1,0:T(1,128)}', space=vmem, size = 0x9000, scoped, tag = 'internal scratch']
  %s0 = inlined_call_operand.vmem [shape: bf16[64,96], index: 0, kind: input, shape index: {}]
  %s1 = inlined_call_operand.vmem [shape: bf16[96,16], index: 1, kind: input, shape index: {}]
  %s2 = inlined_call_operand.vmem [shape: f32[4,256], index: 2, kind: output, shape index: {}]
  %s3 = sld [smem:[#allocation0]]
  $region18: #{satt3_forward.1} parent=0
    _
  %s5 = ssub.s32 1, %s3
  %s6 = scalar_select 0, %s5, %s3
  // Predicated region
  $region2: #{satt3_forward.1} parent=0 // pred_check
    _
  $region3: #{satt3_forward.1} parent=0 // pred_check_branch
    %8 = sbr.rel (0) target = $region5
  $region4: #{satt3_forward.1} parent=0 // pred_region
    _
  $region5: #{satt3_forward.1} parent=0 // pred_fallthru
    _
  // Predicated region
  $region6: #{satt3_forward.1} parent=0 // pred_check
    _
  $region7: #{satt3_forward.1} parent=0 // pred_check_branch
    %10 = sbr.rel (0) target = $region9
  $region8: #{satt3_forward.1} parent=0 // pred_region
    _
  $region9: #{satt3_forward.1} parent=0 // pred_fallthru
    _
  %v12 = vld [vmem:[%s0] sm:$0xf]
  %v13 = vld [vmem:[%s0 + $0x4] sm:$0xf]
  %v14 = vld [vmem:[%s0 + $0x8] sm:$0xf]
  %v15 = vld [vmem:[%s0 + $0xc] sm:$0xf]
  %v16 = vld [vmem:[%s0 + $0x10] sm:$0xf]
  %v17 = vld [vmem:[%s0 + $0x14] sm:$0xf]
  %v18 = vld [vmem:[%s0 + $0x18] sm:$0xf]
  %v19 = vld [vmem:[%s0 + $0x1c] sm:$0xf]
  %v20 = vld [vmem:[%s1] sm:$0xf]
  %v21 = vld [vmem:[%s1 + $0x4] sm:$0xf]
  %v22 = vld [vmem:[%s1 + $0x8] sm:$0xf]
  %v23 = vld [vmem:[%s1 + $0xc] sm:$0xf]
  %v24 = vld [vmem:[%s1 + $0x10] sm:$0xf]
  %v25 = vld [vmem:[%s1 + $0x14] sm:$0xf]
  %v26 = vld [vmem:[%s1 + $0x18] sm:$0xf]
  %v27 = vld [vmem:[%s1 + $0x1c] sm:$0xf]
  %v28 = vld [vmem:[%s1 + $0x20] sm:$0xf]
  %v29 = vld [vmem:[%s1 + $0x24] sm:$0xf]
  %v30 = vld [vmem:[%s1 + $0x28] sm:$0xf]
  %v31 = vld [vmem:[%s1 + $0x2c] sm:$0xf]
  %v40 = vunpack.c.l.b16 %v12
  %v41 = vunpack.c.l.b16 %v13
  %v42 = vunpack.c.l.b16 %v14
  %v43 = vunpack.c.l.b16 %v15
  %v44 = vunpack.c.l.b16 %v16
  %v45 = vunpack.c.l.b16 %v17
  %v46 = vunpack.c.l.b16 %v18
  %v47 = vunpack.c.l.b16 %v19
  %v48 = vpack.c.b16 %v41, %v40
  %v49 = vpack.c.b16 %v43, %v42
  %v50 = vpack.c.b16 %v45, %v44
  %v51 = vpack.c.b16 %v47, %v46
  %v64 = vunpack.c.l.b16 %v20
  %v65 = vunpack.c.l.b16 %v21
  %v66 = vunpack.c.l.b16 %v22
  %v67 = vunpack.c.l.b16 %v23
  %v68 = vunpack.c.l.b16 %v24
  %v69 = vunpack.c.l.b16 %v25
  %v70 = vunpack.c.l.b16 %v26
  %v71 = vunpack.c.l.b16 %v27
  %v72 = vunpack.c.l.b16 %v28
  %v73 = vunpack.c.l.b16 %v29
  %v74 = vunpack.c.l.b16 %v30
  %v75 = vunpack.c.l.b16 %v31
  %v76 = vpack.c.b16 %v65, %v64
  %v77 = vpack.c.b16 %v67, %v66
  %v78 = vpack.c.b16 %v69, %v68
  %v79 = vpack.c.b16 %v71, %v70
  %v80 = vpack.c.b16 %v73, %v72
  %v81 = vpack.c.b16 %v75, %v74
  %vm88 = vcmask 785408
  %v90 = vsel %vm88, %v48, 0
  %v93 = vsel %vm88, %v49, 0
  %v96 = vsel %vm88, %v50, 0
  %v99 = vsel %vm88, %v51, 0
  %101 = vmatpush.bf16.msra.mxu0 0
  %102 = vmatpush.bf16.msra.mxu0 0
  %103 = vmatpush.bf16.msra.mxu0 %v81
  %104 = vmatpush.bf16.msra.mxu0 %v80
  %105 = vmatpush.bf16.msra.mxu0 %v79
  %106 = vmatpush.bf16.msra.mxu0 %v78
  %107 = vmatpush.bf16.msra.mxu0 %v77
  %108 = vmatpush.bf16.msra.mxu0 %v76
  %109 = vmatmul.bf16.gmra.mxu0 %v90
  %v110 = vpop.f32.mrf.mxu0
  %v111 = vadd.f32 0.0, %v110
  %v112 = vpop.f32.mrf.mxu0
  %v113 = vadd.f32 0.0, %v112
  %114 = vmatmul.bf16.gmra.mxu0 %v93
  %v115 = vpop.f32.mrf.mxu0
  %v116 = vadd.f32 0.0, %v115
  %v117 = vpop.f32.mrf.mxu0
  %v118 = vadd.f32 0.0, %v117
  %119 = vmatmul.bf16.gmra.mxu0 %v96
  %v120 = vpop.f32.mrf.mxu0
  %v121 = vadd.f32 0.0, %v120
  %v122 = vpop.f32.mrf.mxu0
  %v123 = vadd.f32 0.0, %v122
  %124 = vmatmul.bf16.gmra.mxu0 %v99
  %v125 = vpop.f32.mrf.mxu0
  %v126 = vadd.f32 0.0, %v125
  %v127 = vpop.f32.mrf.mxu0
  %v128 = vadd.f32 0.0, %v127
  %129 = vdwg.mxu0
  %131 = vset.pattern.permute.xlu0 0
  %132 = vperm.xlu0 %131, %v111
  %v133 = vpop.permute.xlu0 %132
  %136 = vset.pattern.permute.xlu0 0
  %137 = vperm.xlu0 %136, %v113
  %v138 = vpop.permute.xlu0 %137
  %141 = vset.pattern.permute.xlu0 0
  %142 = vperm.xlu0 %141, %v116
  %v143 = vpop.permute.xlu0 %142
  %146 = vset.pattern.permute.xlu0 0
  %147 = vperm.xlu0 %146, %v118
  %v148 = vpop.permute.xlu0 %147
  %151 = vset.pattern.permute.xlu0 0
  %152 = vperm.xlu0 %151, %v121
  %v153 = vpop.permute.xlu0 %152
  %156 = vset.pattern.permute.xlu0 0
  %157 = vperm.xlu0 %156, %v123
  %v158 = vpop.permute.xlu0 %157
  %161 = vset.pattern.permute.xlu0 0
  %162 = vperm.xlu0 %161, %v126
  %v163 = vpop.permute.xlu0 %162
  %166 = vset.pattern.permute.xlu0 0
  %167 = vperm.xlu0 %166, %v128
  %v168 = vpop.permute.xlu0 %167
  %170 = vset.pattern.permute.xlu0 8
  %171 = vperm.xlu0 %170, %v111
  %v172 = vpop.permute.xlu0 %171
  %173 = vset.pattern.permute.xlu0 8
  %174 = vperm.xlu0 %173, %v113
  %v175 = vpop.permute.xlu0 %174
  %176 = vset.pattern.permute.xlu0 8
  %177 = vperm.xlu0 %176, %v116
  %v178 = vpop.permute.xlu0 %177
  %179 = vset.pattern.permute.xlu0 8
  %180 = vperm.xlu0 %179, %v118
  %v181 = vpop.permute.xlu0 %180
  %182 = vset.pattern.permute.xlu0 8
  %183 = vperm.xlu0 %182, %v121
  %v184 = vpop.permute.xlu0 %183
  %185 = vset.pattern.permute.xlu0 8
  %186 = vperm.xlu0 %185, %v123
  %v187 = vpop.permute.xlu0 %186
  %188 = vset.pattern.permute.xlu0 8
  %189 = vperm.xlu0 %188, %v126
  %v190 = vpop.permute.xlu0 %189
  %191 = vset.pattern.permute.xlu0 8
  %192 = vperm.xlu0 %191, %v128
  %v193 = vpop.permute.xlu0 %192
  %v194 = vlaneseq
  %v195 = vand.u32 %v194, 127
  %v196 = vperm.slane %v172, %v195
  %v197 = vadd.s32 %v195, 4294967288
  %v198 = vperm.slane %v175, %v197
  %vm199 = vcmask 130112
  %v200 = vsel %vm199, %v198, %v196
  %v201 = vperm.slane %v178, %v195
  %v202 = vperm.slane %v181, %v197
  %v203 = vsel %vm199, %v202, %v201
  %v204 = vperm.slane %v184, %v195
  %v205 = vperm.slane %v187, %v197
  %v206 = vsel %vm199, %v205, %v204
  %v207 = vperm.slane %v190, %v195
  %v208 = vperm.slane %v193, %v197
  %v209 = vsel %vm199, %v208, %v207
  %vm210 = vcmask 1042434
  %v211 = vsel %vm210, %v200, %v200
  %vm212 = vcmask 1043459
  %v213 = vsel %vm212, %v200, %v211
  %vm214 = vcmask 1044484
  %v215 = vsel %vm214, %v200, %v213
  %vm216 = vcmask 1045509
  %v217 = vsel %vm216, %v200, %v215
  %vm218 = vcmask 1046534
  %v219 = vsel %vm218, %v200, %v217
  %vm220 = vcmask 1047559
  %v221 = vsel %vm220, %v200, %v219
  %v222 = vsel %vm210, %v203, %v203
  %v223 = vsel %vm212, %v203, %v222
  %v224 = vsel %vm214, %v203, %v223
  %v225 = vsel %vm216, %v203, %v224
  %v226 = vsel %vm218, %v203, %v225
  %v227 = vsel %vm220, %v203, %v226
  %v228 = vsel %vm210, %v206, %v206
  %v229 = vsel %vm212, %v206, %v228
  %v230 = vsel %vm214, %v206, %v229
  %v231 = vsel %vm216, %v206, %v230
  %v232 = vsel %vm218, %v206, %v231
  %v233 = vsel %vm220, %v206, %v232
  %v234 = vsel %vm210, %v209, %v209
  %v235 = vsel %vm212, %v209, %v234
  %v236 = vsel %vm214, %v209, %v235
  %v237 = vsel %vm216, %v209, %v236
  %v238 = vsel %vm218, %v209, %v237
  %v239 = vsel %vm220, %v209, %v238
  %v244 = vmul.f32 %v133, %v221
  %v245 = vmul.f32 %v138, %v221
  %v246 = vmul.f32 %v143, %v227
  %v247 = vmul.f32 %v148, %v227
  %v248 = vmul.f32 %v153, %v233
  %v249 = vmul.f32 %v158, %v233
  %v250 = vmul.f32 %v163, %v239
  %v251 = vmul.f32 %v168, %v239
  %252 = vset.pattern.permute.xlu0 1
  %253 = vperm.xlu0 %252, %v111
  %v254 = vpop.permute.xlu0 %253
  %256 = vset.pattern.permute.xlu0 1
  %257 = vperm.xlu0 %256, %v113
  %v258 = vpop.permute.xlu0 %257
  %260 = vset.pattern.permute.xlu0 1
  %261 = vperm.xlu0 %260, %v116
  %v262 = vpop.permute.xlu0 %261
  %264 = vset.pattern.permute.xlu0 1
  %265 = vperm.xlu0 %264, %v118
  %v266 = vpop.permute.xlu0 %265
  %268 = vset.pattern.permute.xlu0 1
  %269 = vperm.xlu0 %268, %v121
  %v270 = vpop.permute.xlu0 %269
  %272 = vset.pattern.permute.xlu0 1
  %273 = vperm.xlu0 %272, %v123
  %v274 = vpop.permute.xlu0 %273
  %276 = vset.pattern.permute.xlu0 1
  %277 = vperm.xlu0 %276, %v126
  %v278 = vpop.permute.xlu0 %277
  %280 = vset.pattern.permute.xlu0 1
  %281 = vperm.xlu0 %280, %v128
  %v282 = vpop.permute.xlu0 %281
  %284 = vset.pattern.permute.xlu0 9
  %285 = vperm.xlu0 %284, %v111
  %v286 = vpop.permute.xlu0 %285
  %287 = vset.pattern.permute.xlu0 9
  %288 = vperm.xlu0 %287, %v113
  %v289 = vpop.permute.xlu0 %288
  %290 = vset.pattern.permute.xlu0 9
  %291 = vperm.xlu0 %290, %v116
  %v292 = vpop.permute.xlu0 %291
  %293 = vset.pattern.permute.xlu0 9
  %294 = vperm.xlu0 %293, %v118
  %v295 = vpop.permute.xlu0 %294
  %296 = vset.pattern.permute.xlu0 9
  %297 = vperm.xlu0 %296, %v121
  %v298 = vpop.permute.xlu0 %297
  %299 = vset.pattern.permute.xlu0 9
  %300 = vperm.xlu0 %299, %v123
  %v301 = vpop.permute.xlu0 %300
  %302 = vset.pattern.permute.xlu0 9
  %303 = vperm.xlu0 %302, %v126
  %v304 = vpop.permute.xlu0 %303
  %305 = vset.pattern.permute.xlu0 9
  %306 = vperm.xlu0 %305, %v128
  %v307 = vpop.permute.xlu0 %306
  %v308 = vperm.slane %v286, %v195
  %v309 = vperm.slane %v289, %v197
  %v310 = vsel %vm199, %v309, %v308
  %v311 = vperm.slane %v292, %v195
  %v312 = vperm.slane %v295, %v197
  %v313 = vsel %vm199, %v312, %v311
  %v314 = vperm.slane %v298, %v195
  %v315 = vperm.slane %v301, %v197
  %v316 = vsel %vm199, %v315, %v314
  %v317 = vperm.slane %v304, %v195
  %v318 = vperm.slane %v307, %v197
  %v319 = vsel %vm199, %v318, %v317
  %v320 = vsel %vm210, %v310, %v310
  %v321 = vsel %vm212, %v310, %v320
  %v322 = vsel %vm214, %v310, %v321
  %v323 = vsel %vm216, %v310, %v322
  %v324 = vsel %vm218, %v310, %v323
  %v325 = vsel %vm220, %v310, %v324
  %v326 = vsel %vm210, %v313, %v313
  %v327 = vsel %vm212, %v313, %v326
  %v328 = vsel %vm214, %v313, %v327
  %v329 = vsel %vm216, %v313, %v328
  %v330 = vsel %vm218, %v313, %v329
  %v331 = vsel %vm220, %v313, %v330
  %v332 = vsel %vm210, %v316, %v316
  %v333 = vsel %vm212, %v316, %v332
  %v334 = vsel %vm214, %v316, %v333
  %v335 = vsel %vm216, %v316, %v334
  %v336 = vsel %vm218, %v316, %v335
  %v337 = vsel %vm220, %v316, %v336
  %v338 = vsel %vm210, %v319, %v319
  %v339 = vsel %vm212, %v319, %v338
  %v340 = vsel %vm214, %v319, %v339
  %v341 = vsel %vm216, %v319, %v340
  %v342 = vsel %vm218, %v319, %v341
  %v343 = vsel %vm220, %v319, %v342
  %v348 = vmul.f32 %v254, %v325
  %v349 = vmul.f32 %v258, %v325
  %v350 = vmul.f32 %v262, %v331
  %v351 = vmul.f32 %v266, %v331
  %v352 = vmul.f32 %v270, %v337
  %v353 = vmul.f32 %v274, %v337
  %v354 = vmul.f32 %v278, %v343
  %v355 = vmul.f32 %v282, %v343
  %v356 = vadd.f32 %v244, %v348
  %v357 = vadd.f32 %v245, %v349
  %v358 = vadd.f32 %v246, %v350
  %v359 = vadd.f32 %v247, %v351
  %v360 = vadd.f32 %v248, %v352
  %v361 = vadd.f32 %v249, %v353
  %v362 = vadd.f32 %v250, %v354
  %v363 = vadd.f32 %v251, %v355
  %v364 = vmul.f32 %v356, 0.5
  %v365 = vmul.f32 %v357, 0.5
  %v366 = vmul.f32 %v358, 0.5
  %v367 = vmul.f32 %v359, 0.5
  %v368 = vmul.f32 %v360, 0.5
  %v369 = vmul.f32 %v361, 0.5
  %v370 = vmul.f32 %v362, 0.5
  %v371 = vmul.f32 %v363, 0.5
  %v372 = vtanh.pop %v364
  %v373 = vtanh.pop %v365
  %v374 = vtanh.pop %v366
  %v375 = vtanh.pop %v367
  %v376 = vtanh.pop %v368
  %v377 = vtanh.pop %v369
  %v378 = vtanh.pop %v370
  %v379 = vtanh.pop %v371
  %v380 = vmul.f32 %v372, 0.125
  %v381 = vmul.f32 %v373, 0.125
  %v382 = vmul.f32 %v374, 0.125
  %v383 = vmul.f32 %v375, 0.125
  %v384 = vmul.f32 %v376, 0.125
  %v385 = vmul.f32 %v377, 0.125
  %v386 = vmul.f32 %v378, 0.125
  %v387 = vmul.f32 %v379, 0.125
  %v388 = vadd.f32 %v380, 0.5
  %v389 = vadd.f32 %v381, 0.5
  %v390 = vadd.f32 %v382, 0.5
  %v391 = vadd.f32 %v383, 0.5
  %v392 = vadd.f32 %v384, 0.5
  %v393 = vadd.f32 %v385, 0.5
  %v394 = vadd.f32 %v386, 0.5
  %v395 = vadd.f32 %v387, 0.5
  %396 = vset.pattern.permute.xlu0 2
  %397 = vperm.xlu0 %396, %v111
  %v398 = vpop.permute.xlu0 %397
  %400 = vset.pattern.permute.xlu0 2
  %401 = vperm.xlu0 %400, %v113
  %v402 = vpop.permute.xlu0 %401
  %404 = vset.pattern.permute.xlu0 2
  %405 = vperm.xlu0 %404, %v116
  %v406 = vpop.permute.xlu0 %405
  %408 = vset.pattern.permute.xlu0 2
  %409 = vperm.xlu0 %408, %v118
  %v410 = vpop.permute.xlu0 %409
  %412 = vset.pattern.permute.xlu0 2
  %413 = vperm.xlu0 %412, %v121
  %v414 = vpop.permute.xlu0 %413
  %416 = vset.pattern.permute.xlu0 2
  %417 = vperm.xlu0 %416, %v123
  %v418 = vpop.permute.xlu0 %417
  %420 = vset.pattern.permute.xlu0 2
  %421 = vperm.xlu0 %420, %v126
  %v422 = vpop.permute.xlu0 %421
  %424 = vset.pattern.permute.xlu0 2
  %425 = vperm.xlu0 %424, %v128
  %v426 = vpop.permute.xlu0 %425
  %428 = vset.pattern.permute.xlu0 10
  %429 = vperm.xlu0 %428, %v111
  %v430 = vpop.permute.xlu0 %429
  %431 = vset.pattern.permute.xlu0 10
  %432 = vperm.xlu0 %431, %v113
  %v433 = vpop.permute.xlu0 %432
  %434 = vset.pattern.permute.xlu0 10
  %435 = vperm.xlu0 %434, %v116
  %v436 = vpop.permute.xlu0 %435
  %437 = vset.pattern.permute.xlu0 10
  %438 = vperm.xlu0 %437, %v118
  %v439 = vpop.permute.xlu0 %438
  %440 = vset.pattern.permute.xlu0 10
  %441 = vperm.xlu0 %440, %v121
  %v442 = vpop.permute.xlu0 %441
  %443 = vset.pattern.permute.xlu0 10
  %444 = vperm.xlu0 %443, %v123
  %v445 = vpop.permute.xlu0 %444
  %446 = vset.pattern.permute.xlu0 10
  %447 = vperm.xlu0 %446, %v126
  %v448 = vpop.permute.xlu0 %447
  %449 = vset.pattern.permute.xlu0 10
  %450 = vperm.xlu0 %449, %v128
  %v451 = vpop.permute.xlu0 %450
  %v452 = vperm.slane %v430, %v195
  %v453 = vperm.slane %v433, %v197
  %v454 = vsel %vm199, %v453, %v452
  %v455 = vperm.slane %v436, %v195
  %v456 = vperm.slane %v439, %v197
  %v457 = vsel %vm199, %v456, %v455
  %v458 = vperm.slane %v442, %v195
  %v459 = vperm.slane %v445, %v197
  %v460 = vsel %vm199, %v459, %v458
  %v461 = vperm.slane %v448, %v195
  %v462 = vperm.slane %v451, %v197
  %v463 = vsel %vm199, %v462, %v461
  %v464 = vsel %vm210, %v454, %v454
  %v465 = vsel %vm212, %v454, %v464
  %v466 = vsel %vm214, %v454, %v465
  %v467 = vsel %vm216, %v454, %v466
  %v468 = vsel %vm218, %v454, %v467
  %v469 = vsel %vm220, %v454, %v468
  %v470 = vsel %vm210, %v457, %v457
  %v471 = vsel %vm212, %v457, %v470
  %v472 = vsel %vm214, %v457, %v471
  %v473 = vsel %vm216, %v457, %v472
  %v474 = vsel %vm218, %v457, %v473
  %v475 = vsel %vm220, %v457, %v474
  %v476 = vsel %vm210, %v460, %v460
  %v477 = vsel %vm212, %v460, %v476
  %v478 = vsel %vm214, %v460, %v477
  %v479 = vsel %vm216, %v460, %v478
  %v480 = vsel %vm218, %v460, %v479
  %v481 = vsel %vm220, %v460, %v480
  %v482 = vsel %vm210, %v463, %v463
  %v483 = vsel %vm212, %v463, %v482
  %v484 = vsel %vm214, %v463, %v483
  %v485 = vsel %vm216, %v463, %v484
  %v486 = vsel %vm218, %v463, %v485
  %v487 = vsel %vm220, %v463, %v486
  %v492 = vmul.f32 %v398, %v469
  %v493 = vmul.f32 %v402, %v469
  %v494 = vmul.f32 %v406, %v475
  %v495 = vmul.f32 %v410, %v475
  %v496 = vmul.f32 %v414, %v481
  %v497 = vmul.f32 %v418, %v481
  %v498 = vmul.f32 %v422, %v487
  %v499 = vmul.f32 %v426, %v487
  %500 = vset.pattern.permute.xlu0 3
  %501 = vperm.xlu0 %500, %v111
  %v502 = vpop.permute.xlu0 %501
  %504 = vset.pattern.permute.xlu0 3
  %505 = vperm.xlu0 %504, %v113
  %v506 = vpop.permute.xlu0 %505
  %508 = vset.pattern.permute.xlu0 3
  %509 = vperm.xlu0 %508, %v116
  %v510 = vpop.permute.xlu0 %509
  %512 = vset.pattern.permute.xlu0 3
  %513 = vperm.xlu0 %512, %v118
  %v514 = vpop.permute.xlu0 %513
  %516 = vset.pattern.permute.xlu0 3
  %517 = vperm.xlu0 %516, %v121
  %v518 = vpop.permute.xlu0 %517
  %520 = vset.pattern.permute.xlu0 3
  %521 = vperm.xlu0 %520, %v123
  %v522 = vpop.permute.xlu0 %521
  %524 = vset.pattern.permute.xlu0 3
  %525 = vperm.xlu0 %524, %v126
  %v526 = vpop.permute.xlu0 %525
  %528 = vset.pattern.permute.xlu0 3
  %529 = vperm.xlu0 %528, %v128
  %v530 = vpop.permute.xlu0 %529
  %532 = vset.pattern.permute.xlu0 11
  %533 = vperm.xlu0 %532, %v111
  %v534 = vpop.permute.xlu0 %533
  %535 = vset.pattern.permute.xlu0 11
  %536 = vperm.xlu0 %535, %v113
  %v537 = vpop.permute.xlu0 %536
  %538 = vset.pattern.permute.xlu0 11
  %539 = vperm.xlu0 %538, %v116
  %v540 = vpop.permute.xlu0 %539
  %541 = vset.pattern.permute.xlu0 11
  %542 = vperm.xlu0 %541, %v118
  %v543 = vpop.permute.xlu0 %542
  %544 = vset.pattern.permute.xlu0 11
  %545 = vperm.xlu0 %544, %v121
  %v546 = vpop.permute.xlu0 %545
  %547 = vset.pattern.permute.xlu0 11
  %548 = vperm.xlu0 %547, %v123
  %v549 = vpop.permute.xlu0 %548
  %550 = vset.pattern.permute.xlu0 11
  %551 = vperm.xlu0 %550, %v126
  %v552 = vpop.permute.xlu0 %551
  %553 = vset.pattern.permute.xlu0 11
  %554 = vperm.xlu0 %553, %v128
  %v555 = vpop.permute.xlu0 %554
  %v556 = vperm.slane %v534, %v195
  %v557 = vperm.slane %v537, %v197
  %v558 = vsel %vm199, %v557, %v556
  %v559 = vperm.slane %v540, %v195
  %v560 = vperm.slane %v543, %v197
  %v561 = vsel %vm199, %v560, %v559
  %v562 = vperm.slane %v546, %v195
  %v563 = vperm.slane %v549, %v197
  %v564 = vsel %vm199, %v563, %v562
  %v565 = vperm.slane %v552, %v195
  %v566 = vperm.slane %v555, %v197
  %v567 = vsel %vm199, %v566, %v565
  %v568 = vsel %vm210, %v558, %v558
  %v569 = vsel %vm212, %v558, %v568
  %v570 = vsel %vm214, %v558, %v569
  %v571 = vsel %vm216, %v558, %v570
  %v572 = vsel %vm218, %v558, %v571
  %v573 = vsel %vm220, %v558, %v572
  %v574 = vsel %vm210, %v561, %v561
  %v575 = vsel %vm212, %v561, %v574
  %v576 = vsel %vm214, %v561, %v575
  %v577 = vsel %vm216, %v561, %v576
  %v578 = vsel %vm218, %v561, %v577
  %v579 = vsel %vm220, %v561, %v578
  %v580 = vsel %vm210, %v564, %v564
  %v581 = vsel %vm212, %v564, %v580
  %v582 = vsel %vm214, %v564, %v581
  %v583 = vsel %vm216, %v564, %v582
  %v584 = vsel %vm218, %v564, %v583
  %v585 = vsel %vm220, %v564, %v584
  %v586 = vsel %vm210, %v567, %v567
  %v587 = vsel %vm212, %v567, %v586
  %v588 = vsel %vm214, %v567, %v587
  %v589 = vsel %vm216, %v567, %v588
  %v590 = vsel %vm218, %v567, %v589
  %v591 = vsel %vm220, %v567, %v590
  %v596 = vmul.f32 %v502, %v573
  %v597 = vmul.f32 %v506, %v573
  %v598 = vmul.f32 %v510, %v579
  %v599 = vmul.f32 %v514, %v579
  %v600 = vmul.f32 %v518, %v585
  %v601 = vmul.f32 %v522, %v585
  %v602 = vmul.f32 %v526, %v591
  %v603 = vmul.f32 %v530, %v591
  %v604 = vadd.f32 %v492, %v596
  %v605 = vadd.f32 %v493, %v597
  %v606 = vadd.f32 %v494, %v598
  %v607 = vadd.f32 %v495, %v599
  %v608 = vadd.f32 %v496, %v600
  %v609 = vadd.f32 %v497, %v601
  %v610 = vadd.f32 %v498, %v602
  %v611 = vadd.f32 %v499, %v603
  %v612 = vmul.f32 %v604, 0.5
  %v613 = vmul.f32 %v605, 0.5
  %v614 = vmul.f32 %v606, 0.5
  %v615 = vmul.f32 %v607, 0.5
  %v616 = vmul.f32 %v608, 0.5
  %v617 = vmul.f32 %v609, 0.5
  %v618 = vmul.f32 %v610, 0.5
  %v619 = vmul.f32 %v611, 0.5
  %v620 = vtanh.pop %v612
  %v621 = vtanh.pop %v613
  %v622 = vtanh.pop %v614
  %v623 = vtanh.pop %v615
  %v624 = vtanh.pop %v616
  %v625 = vtanh.pop %v617
  %v626 = vtanh.pop %v618
  %v627 = vtanh.pop %v619
  %v628 = vmul.f32 %v620, 0.125
  %v629 = vmul.f32 %v621, 0.125
  %v630 = vmul.f32 %v622, 0.125
  %v631 = vmul.f32 %v623, 0.125
  %v632 = vmul.f32 %v624, 0.125
  %v633 = vmul.f32 %v625, 0.125
  %v634 = vmul.f32 %v626, 0.125
  %v635 = vmul.f32 %v627, 0.125
  %v636 = vadd.f32 %v388, %v628
  %v637 = vadd.f32 %v389, %v629
  %v638 = vadd.f32 %v390, %v630
  %v639 = vadd.f32 %v391, %v631
  %v640 = vadd.f32 %v392, %v632
  %v641 = vadd.f32 %v393, %v633
  %v642 = vadd.f32 %v394, %v634
  %v643 = vadd.f32 %v395, %v635
  %644 = vset.pattern.permute.xlu0 4
  %645 = vperm.xlu0 %644, %v111
  %v646 = vpop.permute.xlu0 %645
  %648 = vset.pattern.permute.xlu0 4
  %649 = vperm.xlu0 %648, %v113
  %v650 = vpop.permute.xlu0 %649
  %652 = vset.pattern.permute.xlu0 4
  %653 = vperm.xlu0 %652, %v116
  %v654 = vpop.permute.xlu0 %653
  %656 = vset.pattern.permute.xlu0 4
  %657 = vperm.xlu0 %656, %v118
  %v658 = vpop.permute.xlu0 %657
  %660 = vset.pattern.permute.xlu0 4
  %661 = vperm.xlu0 %660, %v121
  %v662 = vpop.permute.xlu0 %661
  %664 = vset.pattern.permute.xlu0 4
  %665 = vperm.xlu0 %664, %v123
  %v666 = vpop.permute.xlu0 %665
  %668 = vset.pattern.permute.xlu0 4
  %669 = vperm.xlu0 %668, %v126
  %v670 = vpop.permute.xlu0 %669
  %672 = vset.pattern.permute.xlu0 4
  %673 = vperm.xlu0 %672, %v128
  %v674 = vpop.permute.xlu0 %673
  %676 = vset.pattern.permute.xlu0 12
  %677 = vperm.xlu0 %676, %v111
  %v678 = vpop.permute.xlu0 %677
  %679 = vset.pattern.permute.xlu0 12
  %680 = vperm.xlu0 %679, %v113
  %v681 = vpop.permute.xlu0 %680
  %682 = vset.pattern.permute.xlu0 12
  %683 = vperm.xlu0 %682, %v116
  %v684 = vpop.permute.xlu0 %683
  %685 = vset.pattern.permute.xlu0 12
  %686 = vperm.xlu0 %685, %v118
  %v687 = vpop.permute.xlu0 %686
  %688 = vset.pattern.permute.xlu0 12
  %689 = vperm.xlu0 %688, %v121
  %v690 = vpop.permute.xlu0 %689
  %691 = vset.pattern.permute.xlu0 12
  %692 = vperm.xlu0 %691, %v123
  %v693 = vpop.permute.xlu0 %692
  %694 = vset.pattern.permute.xlu0 12
  %695 = vperm.xlu0 %694, %v126
  %v696 = vpop.permute.xlu0 %695
  %697 = vset.pattern.permute.xlu0 12
  %698 = vperm.xlu0 %697, %v128
  %v699 = vpop.permute.xlu0 %698
  %v700 = vperm.slane %v678, %v195
  %v701 = vperm.slane %v681, %v197
  %v702 = vsel %vm199, %v701, %v700
  %v703 = vperm.slane %v684, %v195
  %v704 = vperm.slane %v687, %v197
  %v705 = vsel %vm199, %v704, %v703
  %v706 = vperm.slane %v690, %v195
  %v707 = vperm.slane %v693, %v197
  %v708 = vsel %vm199, %v707, %v706
  %v709 = vperm.slane %v696, %v195
  %v710 = vperm.slane %v699, %v197
  %v711 = vsel %vm199, %v710, %v709
  %v712 = vsel %vm210, %v702, %v702
  %v713 = vsel %vm212, %v702, %v712
  %v714 = vsel %vm214, %v702, %v713
  %v715 = vsel %vm216, %v702, %v714
  %v716 = vsel %vm218, %v702, %v715
  %v717 = vsel %vm220, %v702, %v716
  %v718 = vsel %vm210, %v705, %v705
  %v719 = vsel %vm212, %v705, %v718
  %v720 = vsel %vm214, %v705, %v719
  %v721 = vsel %vm216, %v705, %v720
  %v722 = vsel %vm218, %v705, %v721
  %v723 = vsel %vm220, %v705, %v722
  %v724 = vsel %vm210, %v708, %v708
  %v725 = vsel %vm212, %v708, %v724
  %v726 = vsel %vm214, %v708, %v725
  %v727 = vsel %vm216, %v708, %v726
  %v728 = vsel %vm218, %v708, %v727
  %v729 = vsel %vm220, %v708, %v728
  %v730 = vsel %vm210, %v711, %v711
  %v731 = vsel %vm212, %v711, %v730
  %v732 = vsel %vm214, %v711, %v731
  %v733 = vsel %vm216, %v711, %v732
  %v734 = vsel %vm218, %v711, %v733
  %v735 = vsel %vm220, %v711, %v734
  %v740 = vmul.f32 %v646, %v717
  %v741 = vmul.f32 %v650, %v717
  %v742 = vmul.f32 %v654, %v723
  %v743 = vmul.f32 %v658, %v723
  %v744 = vmul.f32 %v662, %v729
  %v745 = vmul.f32 %v666, %v729
  %v746 = vmul.f32 %v670, %v735
  %v747 = vmul.f32 %v674, %v735
  %748 = vset.pattern.permute.xlu0 5
  %749 = vperm.xlu0 %748, %v111
  %v750 = vpop.permute.xlu0 %749
  %752 = vset.pattern.permute.xlu0 5
  %753 = vperm.xlu0 %752, %v113
  %v754 = vpop.permute.xlu0 %753
  %756 = vset.pattern.permute.xlu0 5
  %757 = vperm.xlu0 %756, %v116
  %v758 = vpop.permute.xlu0 %757
  %760 = vset.pattern.permute.xlu0 5
  %761 = vperm.xlu0 %760, %v118
  %v762 = vpop.permute.xlu0 %761
  %764 = vset.pattern.permute.xlu0 5
  %765 = vperm.xlu0 %764, %v121
  %v766 = vpop.permute.xlu0 %765
  %768 = vset.pattern.permute.xlu0 5
  %769 = vperm.xlu0 %768, %v123
  %v770 = vpop.permute.xlu0 %769
  %772 = vset.pattern.permute.xlu0 5
  %773 = vperm.xlu0 %772, %v126
  %v774 = vpop.permute.xlu0 %773
  %776 = vset.pattern.permute.xlu0 5
  %777 = vperm.xlu0 %776, %v128
  %v778 = vpop.permute.xlu0 %777
  %780 = vset.pattern.permute.xlu0 13
  %781 = vperm.xlu0 %780, %v111
  %v782 = vpop.permute.xlu0 %781
  %783 = vset.pattern.permute.xlu0 13
  %784 = vperm.xlu0 %783, %v113
  %v785 = vpop.permute.xlu0 %784
  %786 = vset.pattern.permute.xlu0 13
  %787 = vperm.xlu0 %786, %v116
  %v788 = vpop.permute.xlu0 %787
  %789 = vset.pattern.permute.xlu0 13
  %790 = vperm.xlu0 %789, %v118
  %v791 = vpop.permute.xlu0 %790
  %792 = vset.pattern.permute.xlu0 13
  %793 = vperm.xlu0 %792, %v121
  %v794 = vpop.permute.xlu0 %793
  %795 = vset.pattern.permute.xlu0 13
  %796 = vperm.xlu0 %795, %v123
  %v797 = vpop.permute.xlu0 %796
  %798 = vset.pattern.permute.xlu0 13
  %799 = vperm.xlu0 %798, %v126
  %v800 = vpop.permute.xlu0 %799
  %801 = vset.pattern.permute.xlu0 13
  %802 = vperm.xlu0 %801, %v128
  %v803 = vpop.permute.xlu0 %802
  %v804 = vperm.slane %v782, %v195
  %v805 = vperm.slane %v785, %v197
  %v806 = vsel %vm199, %v805, %v804
  %v807 = vperm.slane %v788, %v195
  %v808 = vperm.slane %v791, %v197
  %v809 = vsel %vm199, %v808, %v807
  %v810 = vperm.slane %v794, %v195
  %v811 = vperm.slane %v797, %v197
  %v812 = vsel %vm199, %v811, %v810
  %v813 = vperm.slane %v800, %v195
  %v814 = vperm.slane %v803, %v197
  %v815 = vsel %vm199, %v814, %v813
  %v816 = vsel %vm210, %v806, %v806
  %v817 = vsel %vm212, %v806, %v816
  %v818 = vsel %vm214, %v806, %v817
  %v819 = vsel %vm216, %v806, %v818
  %v820 = vsel %vm218, %v806, %v819
  %v821 = vsel %vm220, %v806, %v820
  %v822 = vsel %vm210, %v809, %v809
  %v823 = vsel %vm212, %v809, %v822
  %v824 = vsel %vm214, %v809, %v823
  %v825 = vsel %vm216, %v809, %v824
  %v826 = vsel %vm218, %v809, %v825
  %v827 = vsel %vm220, %v809, %v826
  %v828 = vsel %vm210, %v812, %v812
  %v829 = vsel %vm212, %v812, %v828
  %v830 = vsel %vm214, %v812, %v829
  %v831 = vsel %vm216, %v812, %v830
  %v832 = vsel %vm218, %v812, %v831
  %v833 = vsel %vm220, %v812, %v832
  %v834 = vsel %vm210, %v815, %v815
  %v835 = vsel %vm212, %v815, %v834
  %v836 = vsel %vm214, %v815, %v835
  %v837 = vsel %vm216, %v815, %v836
  %v838 = vsel %vm218, %v815, %v837
  %v839 = vsel %vm220, %v815, %v838
  %v844 = vmul.f32 %v750, %v821
  %v845 = vmul.f32 %v754, %v821
  %v846 = vmul.f32 %v758, %v827
  %v847 = vmul.f32 %v762, %v827
  %v848 = vmul.f32 %v766, %v833
  %v849 = vmul.f32 %v770, %v833
  %v850 = vmul.f32 %v774, %v839
  %v851 = vmul.f32 %v778, %v839
  %v852 = vadd.f32 %v740, %v844
  %v853 = vadd.f32 %v741, %v845
  %v854 = vadd.f32 %v742, %v846
  %v855 = vadd.f32 %v743, %v847
  %v856 = vadd.f32 %v744, %v848
  %v857 = vadd.f32 %v745, %v849
  %v858 = vadd.f32 %v746, %v850
  %v859 = vadd.f32 %v747, %v851
  %v860 = vmul.f32 %v852, 0.5
  %v861 = vmul.f32 %v853, 0.5
  %v862 = vmul.f32 %v854, 0.5
  %v863 = vmul.f32 %v855, 0.5
  %v864 = vmul.f32 %v856, 0.5
  %v865 = vmul.f32 %v857, 0.5
  %v866 = vmul.f32 %v858, 0.5
  %v867 = vmul.f32 %v859, 0.5
  %v868 = vtanh.pop %v860
  %v869 = vtanh.pop %v861
  %v870 = vtanh.pop %v862
  %v871 = vtanh.pop %v863
  %v872 = vtanh.pop %v864
  %v873 = vtanh.pop %v865
  %v874 = vtanh.pop %v866
  %v875 = vtanh.pop %v867
  %v876 = vmul.f32 %v868, 0.125
  %v877 = vmul.f32 %v869, 0.125
  %v878 = vmul.f32 %v870, 0.125
  %v879 = vmul.f32 %v871, 0.125
  %v880 = vmul.f32 %v872, 0.125
  %v881 = vmul.f32 %v873, 0.125
  %v882 = vmul.f32 %v874, 0.125
  %v883 = vmul.f32 %v875, 0.125
  %v884 = vadd.f32 %v636, %v876
  %v885 = vadd.f32 %v637, %v877
  %v886 = vadd.f32 %v638, %v878
  %v887 = vadd.f32 %v639, %v879
  %v888 = vadd.f32 %v640, %v880
  %v889 = vadd.f32 %v641, %v881
  %v890 = vadd.f32 %v642, %v882
  %v891 = vadd.f32 %v643, %v883
  %892 = vset.pattern.permute.xlu0 6
  %893 = vperm.xlu0 %892, %v111
  %v894 = vpop.permute.xlu0 %893
  %896 = vset.pattern.permute.xlu0 6
  %897 = vperm.xlu0 %896, %v113
  %v898 = vpop.permute.xlu0 %897
  %900 = vset.pattern.permute.xlu0 6
  %901 = vperm.xlu0 %900, %v116
  %v902 = vpop.permute.xlu0 %901
  %904 = vset.pattern.permute.xlu0 6
  %905 = vperm.xlu0 %904, %v118
  %v906 = vpop.permute.xlu0 %905
  %908 = vset.pattern.permute.xlu0 6
  %909 = vperm.xlu0 %908, %v121
  %v910 = vpop.permute.xlu0 %909
  %912 = vset.pattern.permute.xlu0 6
  %913 = vperm.xlu0 %912, %v123
  %v914 = vpop.permute.xlu0 %913
  %916 = vset.pattern.permute.xlu0 6
  %917 = vperm.xlu0 %916, %v126
  %v918 = vpop.permute.xlu0 %917
  %920 = vset.pattern.permute.xlu0 6
  %921 = vperm.xlu0 %920, %v128
  %v922 = vpop.permute.xlu0 %921
  %924 = vset.pattern.permute.xlu0 14
  %925 = vperm.xlu0 %924, %v111
  %v926 = vpop.permute.xlu0 %925
  %927 = vset.pattern.permute.xlu0 14
  %928 = vperm.xlu0 %927, %v113
  %v929 = vpop.permute.xlu0 %928
  %930 = vset.pattern.permute.xlu0 14
  %931 = vperm.xlu0 %930, %v116
  %v932 = vpop.permute.xlu0 %931
  %933 = vset.pattern.permute.xlu0 14
  %934 = vperm.xlu0 %933, %v118
  %v935 = vpop.permute.xlu0 %934
  %936 = vset.pattern.permute.xlu0 14
  %937 = vperm.xlu0 %936, %v121
  %v938 = vpop.permute.xlu0 %937
  %939 = vset.pattern.permute.xlu0 14
  %940 = vperm.xlu0 %939, %v123
  %v941 = vpop.permute.xlu0 %940
  %942 = vset.pattern.permute.xlu0 14
  %943 = vperm.xlu0 %942, %v126
  %v944 = vpop.permute.xlu0 %943
  %945 = vset.pattern.permute.xlu0 14
  %946 = vperm.xlu0 %945, %v128
  %v947 = vpop.permute.xlu0 %946
  %v948 = vperm.slane %v926, %v195
  %v949 = vperm.slane %v929, %v197
  %v950 = vsel %vm199, %v949, %v948
  %v951 = vperm.slane %v932, %v195
  %v952 = vperm.slane %v935, %v197
  %v953 = vsel %vm199, %v952, %v951
  %v954 = vperm.slane %v938, %v195
  %v955 = vperm.slane %v941, %v197
  %v956 = vsel %vm199, %v955, %v954
  %v957 = vperm.slane %v944, %v195
  %v958 = vperm.slane %v947, %v197
  %v959 = vsel %vm199, %v958, %v957
  %v960 = vsel %vm210, %v950, %v950
  %v961 = vsel %vm212, %v950, %v960
  %v962 = vsel %vm214, %v950, %v961
  %v963 = vsel %vm216, %v950, %v962
  %v964 = vsel %vm218, %v950, %v963
  %v965 = vsel %vm220, %v950, %v964
  %v966 = vsel %vm210, %v953, %v953
  %v967 = vsel %vm212, %v953, %v966
  %v968 = vsel %vm214, %v953, %v967
  %v969 = vsel %vm216, %v953, %v968
  %v970 = vsel %vm218, %v953, %v969
  %v971 = vsel %vm220, %v953, %v970
  %v972 = vsel %vm210, %v956, %v956
  %v973 = vsel %vm212, %v956, %v972
  %v974 = vsel %vm214, %v956, %v973
  %v975 = vsel %vm216, %v956, %v974
  %v976 = vsel %vm218, %v956, %v975
  %v977 = vsel %vm220, %v956, %v976
  %v978 = vsel %vm210, %v959, %v959
  %v979 = vsel %vm212, %v959, %v978
  %v980 = vsel %vm214, %v959, %v979
  %v981 = vsel %vm216, %v959, %v980
  %v982 = vsel %vm218, %v959, %v981
  %v983 = vsel %vm220, %v959, %v982
  %v988 = vmul.f32 %v894, %v965
  %v989 = vmul.f32 %v898, %v965
  %v990 = vmul.f32 %v902, %v971
  %v991 = vmul.f32 %v906, %v971
  %v992 = vmul.f32 %v910, %v977
  %v993 = vmul.f32 %v914, %v977
  %v994 = vmul.f32 %v918, %v983
  %v995 = vmul.f32 %v922, %v983
  %996 = vset.pattern.permute.xlu0 7
  %997 = vperm.xlu0 %996, %v111
  %v998 = vpop.permute.xlu0 %997
  %1000 = vset.pattern.permute.xlu0 7
  %1001 = vperm.xlu0 %1000, %v113
  %v1002 = vpop.permute.xlu0 %1001
  %1004 = vset.pattern.permute.xlu0 7
  %1005 = vperm.xlu0 %1004, %v116
  %v1006 = vpop.permute.xlu0 %1005
  %1008 = vset.pattern.permute.xlu0 7
  %1009 = vperm.xlu0 %1008, %v118
  %v1010 = vpop.permute.xlu0 %1009
  %1012 = vset.pattern.permute.xlu0 7
  %1013 = vperm.xlu0 %1012, %v121
  %v1014 = vpop.permute.xlu0 %1013
  %1016 = vset.pattern.permute.xlu0 7
  %1017 = vperm.xlu0 %1016, %v123
  %v1018 = vpop.permute.xlu0 %1017
  %1020 = vset.pattern.permute.xlu0 7
  %1021 = vperm.xlu0 %1020, %v126
  %v1022 = vpop.permute.xlu0 %1021
  %1024 = vset.pattern.permute.xlu0 7
  %1025 = vperm.xlu0 %1024, %v128
  %v1026 = vpop.permute.xlu0 %1025
  %1028 = vset.pattern.permute.xlu0 15
  %1029 = vperm.xlu0 %1028, %v111
  %v1030 = vpop.permute.xlu0 %1029
  %1031 = vset.pattern.permute.xlu0 15
  %1032 = vperm.xlu0 %1031, %v113
  %v1033 = vpop.permute.xlu0 %1032
  %1034 = vset.pattern.permute.xlu0 15
  %1035 = vperm.xlu0 %1034, %v116
  %v1036 = vpop.permute.xlu0 %1035
  %1037 = vset.pattern.permute.xlu0 15
  %1038 = vperm.xlu0 %1037, %v118
  %v1039 = vpop.permute.xlu0 %1038
  %1040 = vset.pattern.permute.xlu0 15
  %1041 = vperm.xlu0 %1040, %v121
  %v1042 = vpop.permute.xlu0 %1041
  %1043 = vset.pattern.permute.xlu0 15
  %1044 = vperm.xlu0 %1043, %v123
  %v1045 = vpop.permute.xlu0 %1044
  %1046 = vset.pattern.permute.xlu0 15
  %1047 = vperm.xlu0 %1046, %v126
  %v1048 = vpop.permute.xlu0 %1047
  %1049 = vset.pattern.permute.xlu0 15
  %1050 = vperm.xlu0 %1049, %v128
  %v1051 = vpop.permute.xlu0 %1050
  %v1052 = vperm.slane %v1030, %v195
  %v1053 = vperm.slane %v1033, %v197
  %v1054 = vsel %vm199, %v1053, %v1052
  %v1055 = vperm.slane %v1036, %v195
  %v1056 = vperm.slane %v1039, %v197
  %v1057 = vsel %vm199, %v1056, %v1055
  %v1058 = vperm.slane %v1042, %v195
  %v1059 = vperm.slane %v1045, %v197
  %v1060 = vsel %vm199, %v1059, %v1058
  %v1061 = vperm.slane %v1048, %v195
  %v1062 = vperm.slane %v1051, %v197
  %v1063 = vsel %vm199, %v1062, %v1061
  %v1064 = vsel %vm210, %v1054, %v1054
  %v1065 = vsel %vm212, %v1054, %v1064
  %v1066 = vsel %vm214, %v1054, %v1065
  %v1067 = vsel %vm216, %v1054, %v1066
  %v1068 = vsel %vm218, %v1054, %v1067
  %v1069 = vsel %vm220, %v1054, %v1068
  %v1070 = vsel %vm210, %v1057, %v1057
  %v1071 = vsel %vm212, %v1057, %v1070
  %v1072 = vsel %vm214, %v1057, %v1071
  %v1073 = vsel %vm216, %v1057, %v1072
  %v1074 = vsel %vm218, %v1057, %v1073
  %v1075 = vsel %vm220, %v1057, %v1074
  %v1076 = vsel %vm210, %v1060, %v1060
  %v1077 = vsel %vm212, %v1060, %v1076
  %v1078 = vsel %vm214, %v1060, %v1077
  %v1079 = vsel %vm216, %v1060, %v1078
  %v1080 = vsel %vm218, %v1060, %v1079
  %v1081 = vsel %vm220, %v1060, %v1080
  %v1082 = vsel %vm210, %v1063, %v1063
  %v1083 = vsel %vm212, %v1063, %v1082
  %v1084 = vsel %vm214, %v1063, %v1083
  %v1085 = vsel %vm216, %v1063, %v1084
  %v1086 = vsel %vm218, %v1063, %v1085
  %v1087 = vsel %vm220, %v1063, %v1086
  %v1092 = vmul.f32 %v998, %v1069
  %v1093 = vmul.f32 %v1002, %v1069
  %v1094 = vmul.f32 %v1006, %v1075
  %v1095 = vmul.f32 %v1010, %v1075
  %v1096 = vmul.f32 %v1014, %v1081
  %v1097 = vmul.f32 %v1018, %v1081
  %v1098 = vmul.f32 %v1022, %v1087
  %v1099 = vmul.f32 %v1026, %v1087
  %v1100 = vadd.f32 %v988, %v1092
  %v1101 = vadd.f32 %v989, %v1093
  %v1102 = vadd.f32 %v990, %v1094
  %v1103 = vadd.f32 %v991, %v1095
  %v1104 = vadd.f32 %v992, %v1096
  %v1105 = vadd.f32 %v993, %v1097
  %v1106 = vadd.f32 %v994, %v1098
  %v1107 = vadd.f32 %v995, %v1099
  %v1108 = vmul.f32 %v1100, 0.5
  %v1109 = vmul.f32 %v1101, 0.5
  %v1110 = vmul.f32 %v1102, 0.5
  %v1111 = vmul.f32 %v1103, 0.5
  %v1112 = vmul.f32 %v1104, 0.5
  %v1113 = vmul.f32 %v1105, 0.5
  %v1114 = vmul.f32 %v1106, 0.5
  %v1115 = vmul.f32 %v1107, 0.5
  %v1116 = vtanh.pop %v1108
  %v1117 = vtanh.pop %v1109
  %v1118 = vtanh.pop %v1110
  %v1119 = vtanh.pop %v1111
  %v1120 = vtanh.pop %v1112
  %v1121 = vtanh.pop %v1113
  %v1122 = vtanh.pop %v1114
  %v1123 = vtanh.pop %v1115
  %v1124 = vmul.f32 %v1116, 0.125
  %v1125 = vmul.f32 %v1117, 0.125
  %v1126 = vmul.f32 %v1118, 0.125
  %v1127 = vmul.f32 %v1119, 0.125
  %v1128 = vmul.f32 %v1120, 0.125
  %v1129 = vmul.f32 %v1121, 0.125
  %v1130 = vmul.f32 %v1122, 0.125
  %v1131 = vmul.f32 %v1123, 0.125
  %v1132 = vadd.f32 %v884, %v1124
  %v1133 = vadd.f32 %v885, %v1125
  %v1134 = vadd.f32 %v886, %v1126
  %v1135 = vadd.f32 %v887, %v1127
  %v1136 = vadd.f32 %v888, %v1128
  %v1137 = vadd.f32 %v889, %v1129
  %v1138 = vadd.f32 %v890, %v1130
  %v1139 = vadd.f32 %v891, %v1131
  %v1140 = vrot.slane %v1136, 4
  %vm1141 = vcmask 1047556
  %v1142 = vsel %vm1141, %v1140, %v1132
  %v1143 = vrot.slane %v1132, 4
  %v1144 = vsel %vm1141, %v1136, %v1143
  %v1146 = vunpack.c.l.s4 1983009808
  %v1147 = vunpack.c.0.s8 %v1146
  %v1148 = vperm.slane %v1142, %v1147
  %v1150 = vunpack.c.l.s4 1983009808
  %v1151 = vunpack.c.0.s8 %v1150
  %v1152 = vperm.slane %v1144, %v1151
  %v1153 = vrot.slane %v1138, 4
  %v1154 = vsel %vm1141, %v1153, %v1134
  %v1155 = vrot.slane %v1134, 4
  %v1156 = vsel %vm1141, %v1138, %v1155
  %v1158 = vunpack.c.l.s4 1983009808
  %v1159 = vunpack.c.0.s8 %v1158
  %v1160 = vperm.slane %v1154, %v1159
  %v1162 = vunpack.c.l.s4 1983009808
  %v1163 = vunpack.c.0.s8 %v1162
  %v1164 = vperm.slane %v1156, %v1163
  %v1165 = vrot.slane %v1160, 4
  %v1166 = vsel %vm1141, %v1165, %v1148
  %v1167 = vrot.slane %v1148, 4
  %v1168 = vsel %vm1141, %v1160, %v1167
  %v1170 = vunpack.c.l.s4 1934713408
  %v1171 = vunpack.c.0.s8 %v1170
  %v1172 = vperm.slane %v1166, %v1171
  %v1174 = vunpack.c.l.s4 1934713408
  %v1175 = vunpack.c.0.s8 %v1174
  %v1176 = vperm.slane %v1168, %v1175
  %v1177 = vrot.slane %v1164, 4
  %v1178 = vsel %vm1141, %v1177, %v1152
  %v1179 = vrot.slane %v1152, 4
  %v1180 = vsel %vm1141, %v1164, %v1179
  %v1182 = vunpack.c.l.s4 1934713408
  %v1183 = vunpack.c.0.s8 %v1182
  %v1184 = vperm.slane %v1178, %v1183
  %v1186 = vunpack.c.l.s4 1934713408
  %v1187 = vunpack.c.0.s8 %v1186
  %v1188 = vperm.slane %v1180, %v1187
  %v1189 = vrot.slane %v1172, 4
  %v1190 = vsel %vm1141, 0.0, %v1189
  %v1191 = vrot.slane %v1176, 4
  %v1192 = vsel %vm1141, 0.0, %v1191
  %v1193 = vrot.slane %v1184, 4
  %v1194 = vsel %vm1141, 0.0, %v1193
  %v1195 = vrot.slane %v1188, 4
  %v1196 = vsel %vm1141, 0.0, %v1195
  %v1197 = vrot.slane %v1137, 4
  %v1198 = vsel %vm1141, %v1197, %v1133
  %v1199 = vrot.slane %v1133, 4
  %v1200 = vsel %vm1141, %v1137, %v1199
  %v1202 = vunpack.c.l.s4 1983009808
  %v1203 = vunpack.c.0.s8 %v1202
  %v1204 = vperm.slane %v1198, %v1203
  %v1206 = vunpack.c.l.s4 1983009808
  %v1207 = vunpack.c.0.s8 %v1206
  %v1208 = vperm.slane %v1200, %v1207
  %v1209 = vrot.slane %v1139, 4
  %v1210 = vsel %vm1141, %v1209, %v1135
  %v1211 = vrot.slane %v1135, 4
  %v1212 = vsel %vm1141, %v1139, %v1211
  %v1214 = vunpack.c.l.s4 1983009808
  %v1215 = vunpack.c.0.s8 %v1214
  %v1216 = vperm.slane %v1210, %v1215
  %v1218 = vunpack.c.l.s4 1983009808
  %v1219 = vunpack.c.0.s8 %v1218
  %v1220 = vperm.slane %v1212, %v1219
  %v1221 = vrot.slane %v1216, 4
  %v1222 = vsel %vm1141, %v1221, %v1204
  %v1223 = vrot.slane %v1204, 4
  %v1224 = vsel %vm1141, %v1216, %v1223
  %v1226 = vunpack.c.l.s4 1934713408
  %v1227 = vunpack.c.0.s8 %v1226
  %v1228 = vperm.slane %v1222, %v1227
  %v1230 = vunpack.c.l.s4 1934713408
  %v1231 = vunpack.c.0.s8 %v1230
  %v1232 = vperm.slane %v1224, %v1231
  %v1233 = vrot.slane %v1220, 4
  %v1234 = vsel %vm1141, %v1233, %v1208
  %v1235 = vrot.slane %v1208, 4
  %v1236 = vsel %vm1141, %v1220, %v1235
  %v1238 = vunpack.c.l.s4 1934713408
  %v1239 = vunpack.c.0.s8 %v1238
  %v1240 = vperm.slane %v1234, %v1239
  %v1242 = vunpack.c.l.s4 1934713408
  %v1243 = vunpack.c.0.s8 %v1242
  %v1244 = vperm.slane %v1236, %v1243
  %v1245 = vrot.slane %v1228, 4
  %v1246 = vsel %vm1141, 0.0, %v1245
  %v1247 = vrot.slane %v1232, 4
  %v1248 = vsel %vm1141, 0.0, %v1247
  %v1249 = vrot.slane %v1240, 4
  %v1250 = vsel %vm1141, 0.0, %v1249
  %v1251 = vrot.slane %v1244, 4
  %v1252 = vsel %vm1141, 0.0, %v1251
  %1254 = vrot.lane.b32.xlu0 %v1190, 16
  %v1255 = vpop.permute.xlu0 %1254
  %1258 = vrot.lane.b32.xlu0 %v1176, 32
  %v1259 = vpop.permute.xlu0 %1258
  %1262 = vrot.lane.b32.xlu0 %v1192, 48
  %v1263 = vpop.permute.xlu0 %1262
  %1266 = vrot.lane.b32.xlu0 %v1184, 64
  %v1267 = vpop.permute.xlu0 %1266
  %1270 = vrot.lane.b32.xlu0 %v1194, 80
  %v1271 = vpop.permute.xlu0 %1270
  %1274 = vrot.lane.b32.xlu0 %v1188, 96
  %v1275 = vpop.permute.xlu0 %1274
  %1278 = vrot.lane.b32.xlu0 %v1196, 112
  %v1279 = vpop.permute.xlu0 %1278
  %1282 = vrot.lane.b32.xlu0 %v1246, 16
  %v1283 = vpop.permute.xlu0 %1282
  %1286 = vrot.lane.b32.xlu0 %v1232, 32
  %v1287 = vpop.permute.xlu0 %1286
  %1290 = vrot.lane.b32.xlu0 %v1248, 48
  %v1291 = vpop.permute.xlu0 %1290
  %1294 = vrot.lane.b32.xlu0 %v1240, 64
  %v1295 = vpop.permute.xlu0 %1294
  %1298 = vrot.lane.b32.xlu0 %v1250, 80
  %v1299 = vpop.permute.xlu0 %1298
  %1302 = vrot.lane.b32.xlu0 %v1244, 96
  %v1303 = vpop.permute.xlu0 %1302
  %1306 = vrot.lane.b32.xlu0 %v1252, 112
  %v1307 = vpop.permute.xlu0 %1306
  %vm1309 = vcmask 130048
  %v1310 = vsel %vm1309, %v1172, %v1255
  %vm1311 = vcmask 261120
  %v1312 = vsel %vm1311, %v1310, %v1259
  %vm1313 = vcmask 392192
  %v1314 = vsel %vm1313, %v1312, %v1263
  %vm1315 = vcmask 523264
  %v1316 = vsel %vm1315, %v1314, %v1267
  %vm1317 = vcmask 654336
  %v1318 = vsel %vm1317, %v1316, %v1271
  %v1319 = vsel %vm88, %v1318, %v1275
  %vm1320 = vcmask 916480
  %v1321 = vsel %vm1320, %v1319, %v1279
  %v1322 = vsel %vm1309, %v1228, %v1283
  %v1323 = vsel %vm1311, %v1322, %v1287
  %v1324 = vsel %vm1313, %v1323, %v1291
  %v1325 = vsel %vm1315, %v1324, %v1295
  %v1326 = vsel %vm1317, %v1325, %v1299
  %v1327 = vsel %vm88, %v1326, %v1303
  %v1328 = vsel %vm1320, %v1327, %v1307
  %v1331 = vrot.slane %v1328, 4
  %vm1332 = vcmask 1043456
  %v1333 = vsel %vm1332, %v1321, %v1331
  %1335 = vst [vmem:[%s2] sm:$0xff] %v1333
  // Predicated region
  $region10: #{satt3_forward.1} parent=0 // pred_check
    _
  $region11: #{satt3_forward.1} parent=0 // pred_check_branch
    %1337 = sbr.rel (0) target = $region13
  $region12: #{satt3_forward.1} parent=0 // pred_region
    _
  $region13: #{satt3_forward.1} parent=0 // pred_fallthru
    _
  // Predicated region
  $region14: #{satt3_forward.1} parent=0 // pred_check
    _
  $region15: #{satt3_forward.1} parent=0 // pred_check_branch
    %1339 = sbr.rel (0) target = $region17
  $region16: #{satt3_forward.1} parent=0 // pred_region
    _
  $region17: #{satt3_forward.1} parent=0 // pred_fallthru
    _

</llo_original>
